<compile_context>
chip_gen: v7x
topology: tpu7x:2x2x1
jax: 0.10.0
libtpu: 0.0.40
codegen_flags: <defaults>
</compile_context>

<pallas_src>
import jax
import jax.numpy as jnp
from jax.experimental import pallas as pl
from jax.experimental.pallas import tpu as pltpu

_LANE = 128


def moon_classifier_kernel(xT_ref, w1_ref, b1_ref, cwT_ref, cb_ref,
                           w2c_ref, b2_ref, o_ref):
    # Per grid step (batch on the lane axis):
    #   xT:  (IN, TB)   IN == 2
    #   w1:  (H, IN)    (PyTorch linear1.weight layout)
    #   b1:  (H, 1)
    #   cwT: (H, H)     (custom_weight transposed)
    #   cb:  (H, 1)
    #   w2c: (H, OUT)   (linear2.weight transposed), OUT == 1
    #   b2:  (1, 1)     scalar, lives in SMEM
    #   o:   (OUT, TB)
    xT = xT_ref[...]
    in_dim = xT.shape[0]

    # ---- linear1 + relu : K==2 outer-product FMAs on full-lane vregs ----
    h = w1_ref[:, 0:1] * xT[0:1, :]                       # (H, TB)
    for k in range(1, in_dim):                            # static unroll (IN==2)
        h = h + w1_ref[:, k:k + 1] * xT[k:k + 1, :]
    h = jnp.maximum(h + b1_ref[...], 0.0)

    # ---- custom 32x32 matmul + bias + relu : MXU, N = TB stays lane-dense ----
    h = jnp.dot(cwT_ref[...], h, preferred_element_type=jnp.float32)
    h = jnp.maximum(h + cb_ref[...], 0.0)

    # ---- linear2 (OUT == 1) : 32-sublane reduce -> lane-dense (1, TB) row ----
    z = jnp.sum(h * w2c_ref[...], axis=0, keepdims=True) + b2_ref[0, 0]

    # ---- sigmoid (exact reciprocal; 1/(1+inf) -> 0 is the correct limit) ----
    o_ref[...] = (1.0 / (1.0 + jnp.exp(-z))).astype(o_ref.dtype)


def _resident_spec(arr):
    # Whole array, same block every grid step -> stays pinned in VMEM.
    return pl.BlockSpec(arr.shape, lambda i: (0,) * arr.ndim)


def moon_classifier_forward(x, params, *, tile_b=8192):
    """x: (B, input_dim) float32. params: kernel-layout dict (see prepare_params)."""
    B, in_dim = x.shape
    hidden_dim, out_dim = params["w2c"].shape
    if out_dim != 1:
        # TODO(synk): generalize the lane-dense GEMV / SMEM-bias path to OUT > 1.
        raise NotImplementedError("kernel is specialised for output_dim == 1")

    # Batch rides the lane axis -> pad to a multiple of 128 lanes.
    rows = max(_LANE, ((B + _LANE - 1) // _LANE) * _LANE)

    # Tile: as large as tile_b, but keep >= 2 grid steps whenever the batch
    # spans more than one lane chunk so both v7x TensorCores get work.
    tb = min(tile_b, rows)
    if rows >= 2 * _LANE:
        half = (((rows + 1) // 2 + _LANE - 1) // _LANE) * _LANE
        tb = min(tb, half)
    tb = max(_LANE, (tb // _LANE) * _LANE)
    grid = pl.cdiv(rows, tb)
    b_pad = grid * tb

    xT = jnp.transpose(x.astype(jnp.float32))              # (IN, B)
    if b_pad != B:
        xT = jnp.pad(xT, ((0, 0), (0, b_pad - B)))

    out = pl.pallas_call(
        moon_classifier_kernel,
        out_shape=jax.ShapeDtypeStruct((out_dim, b_pad), jnp.float32),
        grid=(grid,),
        in_specs=[
            pl.BlockSpec((in_dim, tb), lambda i: (0, i)),          # xT streamed
            _resident_spec(params["w1"]),                          # (H, IN)
            _resident_spec(params["b1"]),                          # (H, 1)
            _resident_spec(params["cwT"]),                         # (H, H)
            _resident_spec(params["cb"]),                          # (H, 1)
            _resident_spec(params["w2c"]),                         # (H, 1)
            pl.BlockSpec(memory_space=pltpu.MemorySpace.SMEM),     # b2 scalar
        ],
        out_specs=pl.BlockSpec((out_dim, tb), lambda i: (0, i)),
        compiler_params=pltpu.CompilerParams(
            dimension_semantics=("parallel",),
            vmem_limit_bytes=32 * 1024 * 1024),
    )(xT, params["w1"], params["b1"], params["cwT"], params["cb"],
      params["w2c"], params["b2"])

    return out[:, :B].T                                            # (B, OUT)


def init_torch_layout_params(key, input_dim=2, hidden_dim=32, output_dim=1):
    """Deterministic synthetic init mirroring the PyTorch module's parameter layouts."""
    k1, k2, k3, k4, k5 = jax.random.split(key, 5)
    return {
        "lin1_w": jax.random.normal(k1, (hidden_dim, input_dim), jnp.float32) * 0.1,
        "lin1_b": jax.random.normal(k2, (hidden_dim,), jnp.float32) * 0.1,
        "cw":     jax.random.normal(k3, (hidden_dim, hidden_dim), jnp.float32),
        "cb":     jnp.zeros((hidden_dim,), jnp.float32),
        "lin2_w": jax.random.normal(k4, (output_dim, hidden_dim), jnp.float32) * 0.1,
        "lin2_b": jax.random.normal(k5, (output_dim,), jnp.float32) * 0.1,
    }


def prepare_params(p):
    """Kernel-layout (batch-on-lanes / transposed) views of the PyTorch params."""
    return {
        "w1":  p["lin1_w"],                 # (H, IN)  == linear1.weight
        "b1":  p["lin1_b"].reshape(-1, 1),  # (H, 1)
        "cwT": p["cw"].T,                   # (H, H)   == custom_weight.T
        "cb":  p["cb"].reshape(-1, 1),      # (H, 1)
        "w2c": p["lin2_w"].T,               # (H, OUT) == linear2.weight.T
        "b2":  p["lin2_b"].reshape(1, -1),  # (1, OUT)
    }


def reference_forward(x, p):
    h = jnp.maximum(x @ p["lin1_w"].T + p["lin1_b"], 0.0)
    h = jnp.maximum(h @ p["cw"] + p["cb"], 0.0)
    return jax.nn.sigmoid(h @ p["lin2_w"].T + p["lin2_b"])


if __name__ == "__main__":
    key = jax.random.PRNGKey(0)
    kx, kp = jax.random.split(key)

    batch, input_dim, hidden_dim, output_dim = 8, 2, 32, 1
    x = jax.random.normal(kx, (batch, input_dim), jnp.float32)
    torch_params = init_torch_layout_params(kp, input_dim, hidden_dim, output_dim)
    params = prepare_params(torch_params)

    out = moon_classifier_forward(x, params)
    out = jax.block_until_ready(out)

    ref = reference_forward(x, torch_params)
    assert out.shape == (batch, output_dim)
    # Tolerance covers MXU multi-pass f32 matmul vs XLA reference precision
    # differences (the sigmoid itself now uses an exact reciprocal).
    assert jnp.allclose(out, ref, atol=2e-3, rtol=2e-3), \
        float(jnp.max(jnp.abs(out - ref)))

    print("KERNEL_OK")
</pallas_src>

<mosaic_0001>
module attributes {stable_mosaic.version = 11 : i64} {
  func.func @moon_classifier_kernel(%arg0: i32, %arg1: memref<2x128xf32, #tpu.memory_space<vmem>>, %arg2: memref<32x2xf32, #tpu.memory_space<vmem>>, %arg3: memref<32x1xf32, #tpu.memory_space<vmem>>, %arg4: memref<32x32xf32, #tpu.memory_space<vmem>>, %arg5: memref<32x1xf32, #tpu.memory_space<vmem>>, %arg6: memref<32x1xf32, #tpu.memory_space<vmem>>, %arg7: memref<1x1xf32, #tpu.memory_space<smem>>, %arg8: memref<1x128xf32, #tpu.memory_space<vmem>>) attributes {dimension_semantics = [#tpu.dimension_semantics<parallel>], iteration_bounds = array<i64: 1>, scalar_prefetch = 0 : i64, scratch_operands = 0 : i64, tpu.core_type = #tpu.core_type<tc>, window_params = [{transform_indices = @transform_0, window_bounds = array<i64: 2, 128>}, {pipeline_mode = #tpu.pipeline_mode<synchronous>, transform_indices = @transform_1, window_bounds = array<i64: 32, 2>}, {pipeline_mode = #tpu.pipeline_mode<synchronous>, transform_indices = @transform_2, window_bounds = array<i64: 32, 1>}, {pipeline_mode = #tpu.pipeline_mode<synchronous>, transform_indices = @transform_3, window_bounds = array<i64: 32, 32>}, {pipeline_mode = #tpu.pipeline_mode<synchronous>, transform_indices = @transform_4, window_bounds = array<i64: 32, 1>}, {pipeline_mode = #tpu.pipeline_mode<synchronous>, transform_indices = @transform_5, window_bounds = array<i64: 32, 1>}, {transform_indices = @transform_6, window_bounds = array<i64: 1, 1>}, {transform_indices = @transform_7, window_bounds = array<i64: 1, 128>}]} {
    %c0 = arith.constant 0 : index
    %c0_0 = arith.constant 0 : index
    %0 = vector.load %arg1[%c0, %c0_0] : memref<2x128xf32, #tpu.memory_space<vmem>>, vector<2x128xf32>
    %c0_1 = arith.constant 0 : index
    %c0_2 = arith.constant 0 : index
    %1 = vector.load %arg2[%c0_1, %c0_2] : memref<32x2xf32, #tpu.memory_space<vmem>>, vector<32x1xf32>
    %2 = vector.extract_strided_slice %0 {offsets = [0, 0], sizes = [1, 128], strides = [1, 1]} : vector<2x128xf32> to vector<1x128xf32>
    %3 = vector.broadcast %1 : vector<32x1xf32> to vector<32x128xf32>
    %4 = vector.broadcast %2 : vector<1x128xf32> to vector<32x128xf32>
    %5 = arith.mulf %3, %4 : vector<32x128xf32>
    %c0_3 = arith.constant 0 : index
    %c1 = arith.constant 1 : index
    %6 = vector.load %arg2[%c0_3, %c1] : memref<32x2xf32, #tpu.memory_space<vmem>>, vector<32x1xf32>
    %7 = vector.extract_strided_slice %0 {offsets = [1, 0], sizes = [1, 128], strides = [1, 1]} : vector<2x128xf32> to vector<1x128xf32>
    %8 = vector.broadcast %6 : vector<32x1xf32> to vector<32x128xf32>
    %9 = vector.broadcast %7 : vector<1x128xf32> to vector<32x128xf32>
    %10 = arith.mulf %8, %9 : vector<32x128xf32>
    %11 = arith.addf %5, %10 : vector<32x128xf32>
    %c0_4 = arith.constant 0 : index
    %c0_5 = arith.constant 0 : index
    %12 = vector.load %arg3[%c0_4, %c0_5] : memref<32x1xf32, #tpu.memory_space<vmem>>, vector<32x1xf32>
    %13 = vector.broadcast %12 : vector<32x1xf32> to vector<32x128xf32>
    %14 = arith.addf %11, %13 : vector<32x128xf32>
    %cst = arith.constant 0.000000e+00 : f32
    %15 = vector.broadcast %cst : f32 to vector<32x128xf32>
    %16 = arith.maximumf %14, %15 : vector<32x128xf32>
    %c0_6 = arith.constant 0 : index
    %c0_7 = arith.constant 0 : index
    %17 = vector.load %arg4[%c0_6, %c0_7] : memref<32x32xf32, #tpu.memory_space<vmem>>, vector<32x32xf32>
    %cst_8 = arith.constant dense<0.000000e+00> : vector<32x128xf32>
    %18 = tpu.matmul %17, %16, %cst_8 {dimension_numbers = #tpu.dot_dimension_numbers<[1], [0], [0], [1], [0, 0, 1, 1], [], []>} : vector<32x32xf32>, vector<32x128xf32>, vector<32x128xf32> -> vector<32x128xf32>
    %c0_9 = arith.constant 0 : index
    %c0_10 = arith.constant 0 : index
    %19 = vector.load %arg5[%c0_9, %c0_10] : memref<32x1xf32, #tpu.memory_space<vmem>>, vector<32x1xf32>
    %20 = vector.broadcast %19 : vector<32x1xf32> to vector<32x128xf32>
    %21 = arith.addf %18, %20 : vector<32x128xf32>
    %cst_11 = arith.constant 0.000000e+00 : f32
    %22 = vector.broadcast %cst_11 : f32 to vector<32x128xf32>
    %23 = arith.maximumf %21, %22 : vector<32x128xf32>
    %c0_12 = arith.constant 0 : index
    %c0_13 = arith.constant 0 : index
    %24 = vector.load %arg6[%c0_12, %c0_13] : memref<32x1xf32, #tpu.memory_space<vmem>>, vector<32x1xf32>
    %25 = vector.broadcast %24 : vector<32x1xf32> to vector<32x128xf32>
    %26 = arith.mulf %23, %25 : vector<32x128xf32>
    %cst_14 = arith.constant dense<0.000000e+00> : vector<128xf32>
    %27 = vector.multi_reduction <add>, %26, %cst_14 [0] : vector<32x128xf32> to vector<128xf32>
    %28 = vector.shape_cast %27 : vector<128xf32> to vector<1x128xf32>
    %c0_15 = arith.constant 0 : index
    %c0_16 = arith.constant 0 : index
    %29 = memref.load %arg7[%c0_15, %c0_16] : memref<1x1xf32, #tpu.memory_space<smem>>
    %30 = vector.broadcast %29 : f32 to vector<1x128xf32>
    %31 = arith.addf %28, %30 : vector<1x128xf32>
    %cst_17 = arith.constant 0.000000e+00 : f32
    %32 = vector.broadcast %cst_17 : f32 to vector<1x128xf32>
    %33 = arith.subf %32, %31 : vector<1x128xf32>
    %34 = math.exp %33 : vector<1x128xf32>
    %cst_18 = arith.constant 1.000000e+00 : f32
    %35 = vector.broadcast %cst_18 : f32 to vector<1x128xf32>
    %36 = arith.addf %35, %34 : vector<1x128xf32>
    %cst_19 = arith.constant 1.000000e+00 : f32
    %37 = vector.broadcast %cst_19 : f32 to vector<1x128xf32>
    %38 = arith.divf %37, %36 : vector<1x128xf32>
    %c0_20 = arith.constant 0 : index
    %c0_21 = arith.constant 0 : index
    %39 = vector.load %arg8[%c0_20, %c0_21] : memref<1x128xf32, #tpu.memory_space<vmem>>, vector<1x128xf32>
    tpu.vector_store %arg8[%c0_20, %c0_21], %38 {strides = array<i32>} : memref<1x128xf32, #tpu.memory_space<vmem>>, vector<1x128xf32>,
    return
  }
  func.func @transform_0(%arg0: i32) -> (i32, i32) {
    %c0_i32 = arith.constant 0 : i32
    %c0_i32_0 = arith.constant 0 : i32
    return %c0_i32, %arg0 : i32, i32
  }
  func.func @transform_1(%arg0: i32) -> (i32, i32) {
    %c0_i32 = arith.constant 0 : i32
    %c0_i32_0 = arith.constant 0 : i32
    %c0_i32_1 = arith.constant 0 : i32
    return %c0_i32, %c0_i32_0 : i32, i32
  }
  func.func @transform_2(%arg0: i32) -> (i32, i32) {
    %c0_i32 = arith.constant 0 : i32
    %c0_i32_0 = arith.constant 0 : i32
    %c0_i32_1 = arith.constant 0 : i32
    return %c0_i32, %c0_i32_0 : i32, i32
  }
  func.func @transform_3(%arg0: i32) -> (i32, i32) {
    %c0_i32 = arith.constant 0 : i32
    %c0_i32_0 = arith.constant 0 : i32
    %c0_i32_1 = arith.constant 0 : i32
    return %c0_i32, %c0_i32_0 : i32, i32
  }
  func.func @transform_4(%arg0: i32) -> (i32, i32) {
    %c0_i32 = arith.constant 0 : i32
    %c0_i32_0 = arith.constant 0 : i32
    %c0_i32_1 = arith.constant 0 : i32
    return %c0_i32, %c0_i32_0 : i32, i32
  }
  func.func @transform_5(%arg0: i32) -> (i32, i32) {
    %c0_i32 = arith.constant 0 : i32
    %c0_i32_0 = arith.constant 0 : i32
    %c0_i32_1 = arith.constant 0 : i32
    return %c0_i32, %c0_i32_0 : i32, i32
  }
  func.func @transform_6(%arg0: i32) -> (i32, i32) {
    %c0_i32 = arith.constant 0 : i32
    %c0_i32_0 = arith.constant 0 : i32
    %c0_i32_1 = arith.constant 0 : i32
    return %c0_i32, %c0_i32_0 : i32, i32
  }
  func.func @transform_7(%arg0: i32) -> (i32, i32) {
    %c0_i32 = arith.constant 0 : i32
    %c0_i32_0 = arith.constant 0 : i32
    return %c0_i32, %arg0 : i32, i32
  }
}

</mosaic_0001>

<llo_original>
// kernel: tpu_custom_call.1
$region0: #{tpu_custom_call.1}
  #allocation0 [shape = 'u32[]', space=smem, size = 0x4, offset = 0x4, fixed_abs, tag = 'smem constant byte address 0x4 - core index']
  #allocation1 [shape = 'u32[144,128]{1,0:T(1,128)}', space=vmem, size = 0x12000, scoped, tag = 'internal scratch']
  #allocation2 [shape = 'f32[1,1]{1,0:T(1,128)S(6)}', space=smem, size = 0x200, scoped, tag = 'scoped memory for tpu_custom_call.1']
  %s0 = inlined_call_operand.vmem [shape: f32[2,128], index: 0, kind: input, shape index: {}]
  %s1 = inlined_call_operand.vmem [shape: f32[32,2], index: 1, kind: input, shape index: {}]
  %s2 = inlined_call_operand.vmem [shape: f32[32,1], index: 2, kind: input, shape index: {}]
  %s3 = inlined_call_operand.vmem [shape: f32[32,32], index: 3, kind: input, shape index: {}]
  %s4 = inlined_call_operand.vmem [shape: f32[32,1], index: 4, kind: input, shape index: {}]
  %s5 = inlined_call_operand.vmem [shape: f32[32,1], index: 5, kind: input, shape index: {}]
  %s6 = inlined_call_operand.<no memory space> [shape: f32[1,1], index: 6, kind: input, shape index: {}]
  %s7 = inlined_call_operand.hbm [shape: f32[1,128], index: 7, kind: output, shape index: {}]
  %s8 = sld [smem:[#allocation0]]
  $region38: #{tpu_custom_call.1} parent=0
    _
  %s10 = ssub.s32 1, %s8
  %s11 = scalar_select 0, %s10, %s8
  %12 = sst [smem:[#allocation2]] %s6
  $region1: #{tpu_custom_call.1} parent=0
    #allocation3 [shape = 'u8[512]{0}', space=vmem, size = 0x400, scoped, tag = 'output window, operand 0, single buffered']
    #allocation4 [shape = 's32[1]{0}', space=sflag, size = 0x4, scoped, tag = 'scoped memory for tpu_custom_call.1']
    %13 = vsyncpa [#allocation4], 0
    // Predicated region
    $region2: #{tpu_custom_call.1} parent=1 // pred_check
      _
    $region3: #{tpu_custom_call.1} parent=1 // pred_check_branch
      %15 = sbr.rel (0) target = $region5
    $region4: #{tpu_custom_call.1} parent=1 // pred_region
      _
    $region5: #{tpu_custom_call.1} parent=1 // pred_fallthru
      _
    // Predicated region
    $region6: #{tpu_custom_call.1} parent=1 // pred_check
      _
    $region7: #{tpu_custom_call.1} parent=1 // pred_check_branch
      %17 = sbr.rel (0) target = $region9
    $region8: #{tpu_custom_call.1} parent=1 // pred_region
      _
    $region9: #{tpu_custom_call.1} parent=1 // pred_fallthru
      _
    // Predicated region
    $region10: #{tpu_custom_call.1} parent=1 // pred_check
      _
    $region11: #{tpu_custom_call.1} parent=1 // pred_check_branch
      %19 = sbr.rel (0) target = $region13
    $region12: #{tpu_custom_call.1} parent=1 // pred_region
      _
    $region13: #{tpu_custom_call.1} parent=1 // pred_fallthru
      _
    // Predicated region
    $region14: #{tpu_custom_call.1} parent=1 // pred_check
      _
    $region15: #{tpu_custom_call.1} parent=1 // pred_check_branch
      %21 = sbr.rel (0) target = $region17
    $region16: #{tpu_custom_call.1} parent=1 // pred_region
      _
    $region17: #{tpu_custom_call.1} parent=1 // pred_fallthru
      _
    // Predicated region
    $region18: #{tpu_custom_call.1} parent=1 // pred_check
      _
    $region19: #{tpu_custom_call.1} parent=1 // pred_check_branch
      %23 = sbr.rel (0) target = $region21
    $region20: #{tpu_custom_call.1} parent=1 // pred_region
      _
    $region21: #{tpu_custom_call.1} parent=1 // pred_fallthru
      _
    // Predicated region
    $region22: #{tpu_custom_call.1} parent=1 // pred_check
      _
    $region23: #{tpu_custom_call.1} parent=1 // pred_check_branch
      %25 = sbr.rel (0) target = $region25
    $region24: #{tpu_custom_call.1} parent=1 // pred_region
      _
    $region25: #{tpu_custom_call.1} parent=1 // pred_fallthru
      _
    // Predicated region
    $region26: #{tpu_custom_call.1} parent=1 // pred_check
      _
    $region27: #{tpu_custom_call.1} parent=1 // pred_check_branch
      %27 = sbr.rel (0) target = $region29
    $region28: #{tpu_custom_call.1} parent=1 // pred_region
      _
    $region29: #{tpu_custom_call.1} parent=1 // pred_fallthru
      _
    %v28 = vld [vmem:[%s0] sm:$0x3]
    %v29 = vld [vmem:[%s1] sm:$0xff]
    %v30 = vld [vmem:[%s1 + $0x8] sm:$0xff]
    %v31 = vld [vmem:[%s1 + $0x10] sm:$0xff]
    %v32 = vld [vmem:[%s1 + $0x18] sm:$0xff]
    %34 = vset.pattern.permute.xlu0 0
    %35 = vperm.xlu0 %34, %v29
    %v36 = vpop.permute.xlu0 %35
    %39 = vset.pattern.permute.xlu0 0
    %40 = vperm.xlu0 %39, %v30
    %v41 = vpop.permute.xlu0 %40
    %44 = vset.pattern.permute.xlu0 0
    %45 = vperm.xlu0 %44, %v31
    %v46 = vpop.permute.xlu0 %45
    %49 = vset.pattern.permute.xlu0 0
    %50 = vperm.xlu0 %49, %v32
    %v51 = vpop.permute.xlu0 %50
    %v53 = vlaneseq
    %v54 = vshrl.u32 %v53, 7
    %v55 = vsub.s32 0, %v54
    %v56 = vrot.slane %v28, %v55
    %v57 = vmul.f32 %v36, %v56
    %v58 = vmul.f32 %v41, %v56
    %v59 = vmul.f32 %v46, %v56
    %v60 = vmul.f32 %v51, %v56
    %61 = vset.pattern.permute.xlu0 1
    %62 = vperm.xlu0 %61, %v29
    %v63 = vpop.permute.xlu0 %62
    %65 = vset.pattern.permute.xlu0 1
    %66 = vperm.xlu0 %65, %v30
    %v67 = vpop.permute.xlu0 %66
    %69 = vset.pattern.permute.xlu0 1
    %70 = vperm.xlu0 %69, %v31
    %v71 = vpop.permute.xlu0 %70
    %73 = vset.pattern.permute.xlu0 1
    %74 = vperm.xlu0 %73, %v32
    %v75 = vpop.permute.xlu0 %74
    %v77 = vlaneseq
    %v78 = vshrl.u32 %v77, 7
    %v79 = vsub.s32 1, %v78
    %v80 = vrot.slane %v28, %v79
    %v81 = vmul.f32 %v63, %v80
    %v82 = vmul.f32 %v67, %v80
    %v83 = vmul.f32 %v71, %v80
    %v84 = vmul.f32 %v75, %v80
    %v85 = vadd.f32 %v57, %v81
    %v86 = vadd.f32 %v58, %v82
    %v87 = vadd.f32 %v59, %v83
    %v88 = vadd.f32 %v60, %v84
    %v89 = vld [vmem:[%s2] sm:$0xff]
    %v90 = vld [vmem:[%s2 + $0x8] sm:$0xff]
    %v91 = vld [vmem:[%s2 + $0x10] sm:$0xff]
    %v92 = vld [vmem:[%s2 + $0x18] sm:$0xff]
    %94 = vset.pattern.permute.xlu0 0
    %95 = vperm.xlu0 %94, %v89
    %v96 = vpop.permute.xlu0 %95
    %99 = vset.pattern.permute.xlu0 0
    %100 = vperm.xlu0 %99, %v90
    %v101 = vpop.permute.xlu0 %100
    %104 = vset.pattern.permute.xlu0 0
    %105 = vperm.xlu0 %104, %v91
    %v106 = vpop.permute.xlu0 %105
    %109 = vset.pattern.permute.xlu0 0
    %110 = vperm.xlu0 %109, %v92
    %v111 = vpop.permute.xlu0 %110
    %v113 = vadd.f32 %v85, %v96
    %v114 = vadd.f32 %v86, %v101
    %v115 = vadd.f32 %v87, %v106
    %v116 = vadd.f32 %v88, %v111
    %v117 = vmax.f32 %v113, 0.0
    %v118 = vmax.f32 %v114, 0.0
    %v119 = vmax.f32 %v115, 0.0
    %v120 = vmax.f32 %v116, 0.0
    %v121 = vld [vmem:[%s3] sm:$0xff]
    %v122 = vld [vmem:[%s3 + $0x8] sm:$0xff]
    %v123 = vld [vmem:[%s3 + $0x10] sm:$0xff]
    %v124 = vld [vmem:[%s3 + $0x18] sm:$0xff]
    %v125 = vld [vmem:[%s4] sm:$0xff]
    %v126 = vld [vmem:[%s4 + $0x8] sm:$0xff]
    %v127 = vld [vmem:[%s4 + $0x10] sm:$0xff]
    %v128 = vld [vmem:[%s4 + $0x18] sm:$0xff]
    %130 = vset.pattern.permute.xlu0 0
    %131 = vperm.xlu0 %130, %v125
    %v132 = vpop.permute.xlu0 %131
    %135 = vset.pattern.permute.xlu0 0
    %136 = vperm.xlu0 %135, %v126
    %v137 = vpop.permute.xlu0 %136
    %140 = vset.pattern.permute.xlu0 0
    %141 = vperm.xlu0 %140, %v127
    %v142 = vpop.permute.xlu0 %141
    %145 = vset.pattern.permute.xlu0 0
    %146 = vperm.xlu0 %145, %v128
    %v147 = vpop.permute.xlu0 %146
    %vm149 = vcmask 261120
    %v151 = vsel %vm149, %v121, 0
    %v154 = vsel %vm149, %v122, 0
    %v157 = vsel %vm149, %v123, 0
    %v160 = vsel %vm149, %v124, 0
    %162 = vmatprep.subr.mxu0 0.0
    %163 = vmatpush1.msra.mxu0 %v117
    %164 = vmatprep.subr.mxu0 0.0
    %165 = vmatpush1.msra.mxu0 %v118
    %166 = vmatprep.subr.mxu0 0.0
    %167 = vmatpush1.msra.mxu0 %v119
    %168 = vmatprep.subr.mxu0 0.0
    %169 = vmatpush1.msra.mxu0 %v120
    %170 = vmatprep.subr.mxu0 0.0
    %171 = vmatpush1.msra.mxu0 0.0
    %172 = vmatprep.subr.mxu0 0.0
    %173 = vmatpush1.msra.mxu0 0.0
    %174 = vmatprep.subr.mxu0 0.0
    %175 = vmatpush1.msra.mxu0 0.0
    %176 = vmatprep.subr.mxu0 0.0
    %177 = vmatpush1.msra.mxu0 0.0
    %178 = vmatprep.subr.mxu0 0.0
    %179 = vmatpush1.msra.mxu0 0.0
    %180 = vmatprep.subr.mxu0 0.0
    %181 = vmatpush1.msra.mxu0 0.0
    %182 = vmatprep.subr.mxu0 0.0
    %183 = vmatpush1.msra.mxu0 0.0
    %184 = vmatprep.subr.mxu0 0.0
    %185 = vmatpush1.msra.mxu0 0.0
    %186 = vmatprep.subr.mxu0 0.0
    %187 = vmatpush1.msra.mxu0 0.0
    %188 = vmatprep.subr.mxu0 0.0
    %189 = vmatpush1.msra.mxu0 0.0
    %190 = vmatprep.subr.mxu0 0.0
    %191 = vmatpush1.msra.mxu0 0.0
    %192 = vmatprep.subr.mxu0 0.0
    %193 = vmatpush1.msra.mxu0 0.0
    %194 = vmatprep.subr.mxu0 0.0
    %195 = vmatpush1.msra.mxu0 0.0
    %196 = vmatprep.subr.mxu0 0.0
    %197 = vmatpush1.msra.mxu0 0.0
    %198 = vmatprep.subr.mxu0 0.0
    %199 = vmatpush1.msra.mxu0 0.0
    %200 = vmatprep.subr.mxu0 0.0
    %201 = vmatpush1.msra.mxu0 0.0
    %202 = vmatprep.subr.mxu0 0.0
    %203 = vmatpush1.msra.mxu0 0.0
    %204 = vmatprep.subr.mxu0 0.0
    %205 = vmatpush1.msra.mxu0 0.0
    %206 = vmatprep.subr.mxu0 0.0
    %207 = vmatpush1.msra.mxu0 0.0
    %208 = vmatprep.subr.mxu0 0.0
    %209 = vmatpush1.msra.mxu0 0.0
    %210 = vmatprep.subr.mxu0 0.0
    %211 = vmatpush1.msra.mxu0 0.0
    %212 = vmatprep.subr.mxu0 0.0
    %213 = vmatpush1.msra.mxu0 0.0
    %214 = vmatprep.subr.mxu0 0.0
    %215 = vmatpush1.msra.mxu0 0.0
    %216 = vmatprep.subr.mxu0 0.0
    %217 = vmatpush1.msra.mxu0 0.0
    %218 = vmatprep.subr.mxu0 0.0
    %219 = vmatpush1.msra.mxu0 0.0
    %220 = vmatprep.subr.mxu0 0.0
    %221 = vmatpush1.msra.mxu0 0.0
    %222 = vmatprep.subr.mxu0 0.0
    %223 = vmatpush1.msra.mxu0 0.0
    %224 = vmatprep.subr.mxu0 0.0
    %225 = vmatpush1.msra.mxu0 0.0
    %226 = vmatprep.mubr.f32.mxu0 0.0
    %227 = vmatmul.mubr.f32.gmra.mrb[0].mxu0 %v151
    %v228 = vpop.f32.mrb[0].mxu0
    %v229 = vadd.f32 %v132, %v228
    %v230 = vpop.f32.mrb[0].mxu0
    %231 = vmatprep.mubr.f32.mxu0 0.0
    %232 = vmatmul.mubr.f32.gmra.mrb[0].mxu0 %v154
    %v233 = vpop.f32.mrb[0].mxu0
    %v234 = vadd.f32 %v137, %v233
    %v235 = vpop.f32.mrb[0].mxu0
    %236 = vmatprep.mubr.f32.mxu0 0.0
    %237 = vmatmul.mubr.f32.gmra.mrb[0].mxu0 %v157
    %v238 = vpop.f32.mrb[0].mxu0
    %v239 = vadd.f32 %v142, %v238
    %v240 = vpop.f32.mrb[0].mxu0
    %241 = vmatprep.mubr.f32.mxu0 0.0
    %242 = vmatmul.mubr.f32.gmra.mrb[0].mxu0 %v160
    %v243 = vpop.f32.mrb[0].mxu0
    %v244 = vadd.f32 %v147, %v243
    %v245 = vpop.f32.mrb[0].mxu0
    %246 = vdwg.mxu0
    %v247 = vmax.f32 %v229, 0.0
    %v248 = vmax.f32 %v234, 0.0
    %v249 = vmax.f32 %v239, 0.0
    %v250 = vmax.f32 %v244, 0.0
    %v251 = vld [vmem:[%s5] sm:$0xff]
    %v252 = vld [vmem:[%s5 + $0x8] sm:$0xff]
    %v253 = vld [vmem:[%s5 + $0x10] sm:$0xff]
    %v254 = vld [vmem:[%s5 + $0x18] sm:$0xff]
    %256 = vset.pattern.permute.xlu0 0
    %257 = vperm.xlu0 %256, %v251
    %v258 = vpop.permute.xlu0 %257
    %261 = vset.pattern.permute.xlu0 0
    %262 = vperm.xlu0 %261, %v252
    %v263 = vpop.permute.xlu0 %262
    %266 = vset.pattern.permute.xlu0 0
    %267 = vperm.xlu0 %266, %v253
    %v268 = vpop.permute.xlu0 %267
    %271 = vset.pattern.permute.xlu0 0
    %272 = vperm.xlu0 %271, %v254
    %v273 = vpop.permute.xlu0 %272
    %v275 = vmul.f32 %v247, %v258
    %v276 = vmul.f32 %v248, %v263
    %v277 = vmul.f32 %v249, %v268
    %v278 = vmul.f32 %v250, %v273
    %v279 = vadd.f32 %v275, %v276
    %v280 = vadd.f32 %v279, %v277
    %v281 = vadd.f32 %v280, %v278
    %v282 = vrot.slane %v281, 4
    %v283 = vadd.f32 %v281, %v282
    %v284 = vrot.slane %v283, 2
    %v285 = vadd.f32 %v283, %v284
    %v286 = vrot.slane %v285, 1
    %v287 = vadd.f32 %v285, %v286
    %s288 = sld [smem:[#allocation2]]
    %v289 = vstv %s288
    %v290 = vadd.f32 %v287, %v289
    %v291 = vsub.f32 0.0, %v290
    %v292 = vmul.f32 %v291, 1.442695
    %v293 = vpow.pop %v292
    %v294 = vadd.f32 %v293, 1.0
    %v295 = vrcp.pop %v294
    %v296 = vmul.f32 1.0, %v295
    %297 = vst [vmem:[#allocation3] sm:$0x1] %v296
    // Predicated region
    $region30: #{tpu_custom_call.1} parent=1 // pred_check
      _
    $region31: #{tpu_custom_call.1} parent=1 // pred_check_branch
      %299 = sbr.rel (0) target = $region33
    $region32: #{tpu_custom_call.1} parent=1 // pred_region
      %s301 = ssub.s32 16, 16
      %302 = vsyncadd [#allocation4], %s301
      %s304 = sshll.u32 [#allocation3], 4
      %s305 = int_to_ptr.vmem [resolvable:$true] %s304
      %307 = dma.vmem_to_hbm [thread:$0]  %s305, 16, %s7, [#allocation4]
    $region33: #{tpu_custom_call.1} parent=1 // pred_fallthru
      _
    // Predicated region
    $region34: #{tpu_custom_call.1} parent=1 // pred_check
      _
    $region35: #{tpu_custom_call.1} parent=1 // pred_check_branch
      %309 = sbr.rel (0) target = $region37
    $region36: #{tpu_custom_call.1} parent=1 // pred_region
      %310 = dma.done [#allocation4], 16
    $region37: #{tpu_custom_call.1} parent=1 // pred_fallthru
      _
    %311 = vsyncpa [#allocation4], 1

</llo_original>
